<compile_context>
chip_gen: v5e
topology: v5e:2x2
jax: 0.10.0
libtpu: 0.0.40
codegen_flags: <defaults>
</compile_context>

<pallas_src>
import jax
import jax.numpy as jnp
from jax.experimental import pallas as pl
from jax.experimental.pallas import tpu as pltpu


def _pe_kernel(row_scale_ref, base_ref, o_ref):
    """One grid step writes a (tile_rows, W) slab of the PE table.

    angle[r, l] = abs_row(r) * row_scale[l] + base[l];  out = sin(angle).
    row_scale / base are (1, W) lane vectors precomputed in the wrapper, so
    the only EUP (transcendental) work is the single sin per element; the
    iota / multiply / add are cheap VPU work.
    """
    i = pl.program_id(0)
    tile_rows, w = o_ref.shape
    # Absolute row index, built in int32 then cast (keeps precision for large
    # tables; float32 iota would lose integers past 2^24).
    abs_row = (jax.lax.broadcasted_iota(jnp.int32, (tile_rows, w), 0)
               + i * tile_rows).astype(jnp.float32)
    o_ref[...] = jnp.sin(abs_row * row_scale_ref[...] + base_ref[...])


def _pick_tile_rows(n_rows, w):
    """Largest row-tile that (a) divides n_rows, (b) is a multiple of 8,
    (c) keeps one output buffer <= ~8 MiB (double-buffered => 16 MiB, well
    under the 32 MiB default scoped VMEM, safe on v7x's 64 MiB physical),
    and (d) leaves >= 2 grid steps for non-tiny tables so v7x's two
    TensorCores can both work the "parallel" axis."""
    bytes_per_row = w * 4
    cap = max(8, (8 * 1024 * 1024) // bytes_per_row)
    total_bytes = n_rows * bytes_per_row
    want = n_rows if total_bytes <= (1 << 20) else max(8, n_rows // 2)
    target = min(n_rows, cap, want, 2048)
    best = None
    t = 8
    while t <= target:
        if n_rows % t == 0:
            best = t
        t += 8
    return best if best is not None else n_rows


def vanilla_positional_encoding(x, hidden_dim: int, max_len: int = 1024,
                                tile_rows=None):
    """Mirrors VanillaPositionalEncoding.forward: ignores x's values and
    returns pe of shape (1, max_len, hidden_dim) in float32."""
    b, s, d = x.shape
    assert d == hidden_dim, "input hidden dim must match module hidden_dim"
    assert hidden_dim % 2 == 0, "hidden_dim must be even (sin/cos pairs)"

    total = max_len * hidden_dim

    # Choose a lane-dense 2D layout for the Pallas output.
    if hidden_dim < 128 and 128 % hidden_dim == 0 and total % 128 == 0:
        # Row-major flatten: each 128-lane row covers 128//hidden_dim positions.
        w = 128
        pos_per_row = 128 // hidden_dim
        n_rows = total // 128
    else:
        # hidden_dim already lane-dense (multiple of 128) or irregular
        # (fallback: full-width last dim is always a legal block).
        w = hidden_dim
        pos_per_row = 1
        n_rows = max_len

    # Per-lane frequency / phase vectors -- computed once, O(hidden) work.
    dim_idx = jnp.arange(hidden_dim, dtype=jnp.int32)
    k = (dim_idx // 2).astype(jnp.float32)                       # pair index
    inv_freq = jnp.exp(-(2.0 * k / float(hidden_dim)) * jnp.log(10000.0))
    # cos(x) = sin(x + pi/2): odd dims get a pi/2 phase instead of a 2nd
    # transcendental in the kernel.
    phase = jnp.where(dim_idx % 2 == 1,
                      jnp.float32(jnp.pi / 2), jnp.float32(0.0))

    reps = w // hidden_dim
    inv_freq_w = jnp.tile(inv_freq, reps)
    phase_w = jnp.tile(phase, reps)
    lane_pos = (jnp.arange(w, dtype=jnp.int32) // hidden_dim).astype(jnp.float32)

    # angle[r, l] = (r * pos_per_row + lane_pos[l]) * inv_freq[l] + phase[l]
    #            =  r * row_scale[l] + base[l]
    row_scale = (float(pos_per_row) * inv_freq_w).reshape(1, w)
    base = (lane_pos * inv_freq_w + phase_w).reshape(1, w)

    if tile_rows is None:
        tile_rows = _pick_tile_rows(n_rows, w)
    assert n_rows % tile_rows == 0

    grid = (n_rows // tile_rows,)
    out2d = pl.pallas_call(
        _pe_kernel,
        out_shape=jax.ShapeDtypeStruct((n_rows, w), jnp.float32),
        grid_spec=pltpu.PrefetchScalarGridSpec(
            num_scalar_prefetch=0,
            grid=grid,
            in_specs=[pl.BlockSpec((1, w), lambda i: (0, 0)),   # row_scale
                      pl.BlockSpec((1, w), lambda i: (0, 0))],  # base
            out_specs=pl.BlockSpec((tile_rows, w), lambda i: (i, 0)),
        ),
        compiler_params=pltpu.CompilerParams(
            dimension_semantics=("parallel",)),
    )(row_scale, base)

    # Row-major flatten means this reshape back to the module's output shape
    # is free metadata.
    return out2d.reshape(1, max_len, hidden_dim)


def _pe_reference(hidden_dim: int, max_len: int):
    pos = jnp.arange(max_len, dtype=jnp.float32).reshape(-1, 1)
    dim = jnp.arange(hidden_dim // 2, dtype=jnp.float32).reshape(1, -1)
    div = 10000.0 ** (2.0 * dim / hidden_dim)
    pe = jnp.zeros((1, max_len, hidden_dim), jnp.float32)
    pe = pe.at[:, :, 0::2].set(jnp.sin(pos / div))
    pe = pe.at[:, :, 1::2].set(jnp.cos(pos / div))
    return pe


if __name__ == "__main__":
    hidden_dim = 32
    max_len = 256
    batch, seq = 2, 8

    key = jax.random.PRNGKey(0)
    x = jax.random.normal(key, (batch, seq, hidden_dim), dtype=jnp.float32)

    pe = vanilla_positional_encoding(x, hidden_dim=hidden_dim, max_len=max_len)
    pe = jax.block_until_ready(pe)

    ref = _pe_reference(hidden_dim, max_len)
    assert pe.shape == (1, max_len, hidden_dim)
    # Tolerance: the cos->sin(x+pi/2) phase trick perturbs the sin argument by
    # up to ~0.5 ulp of (pos + pi/2) in f32 (~1.5e-5 at pos~256).
    assert jnp.allclose(pe, ref, atol=5e-5, rtol=1e-5)

    print("KERNEL_OK")
</pallas_src>

<mosaic_0001>
module attributes {stable_mosaic.version = 11 : i64} {
  func.func @_pe_kernel(%arg0: i32, %arg1: memref<1x128xf32, #tpu.memory_space<vmem>>, %arg2: memref<1x128xf32, #tpu.memory_space<vmem>>, %arg3: memref<64x128xf32, #tpu.memory_space<vmem>>) attributes {dimension_semantics = [#tpu.dimension_semantics<parallel>], iteration_bounds = array<i64: 1>, scalar_prefetch = 0 : i64, scratch_operands = 0 : i64, tpu.core_type = #tpu.core_type<tc>, window_params = [{pipeline_mode = #tpu.pipeline_mode<synchronous>, transform_indices = @transform_0, window_bounds = array<i64: 1, 128>}, {pipeline_mode = #tpu.pipeline_mode<synchronous>, transform_indices = @transform_1, window_bounds = array<i64: 1, 128>}, {transform_indices = @transform_2, window_bounds = array<i64: 64, 128>}]} {
    %0 = tpu.iota {dimensions = array<i32: 0>} : vector<64x128xi32>
    %c64_i32 = arith.constant 64 : i32
    %1 = arith.muli %arg0, %c64_i32 : i32
    %2 = vector.broadcast %1 : i32 to vector<64x128xi32>
    %3 = arith.addi %0, %2 : vector<64x128xi32>
    %4 = arith.sitofp %3 : vector<64x128xi32> to vector<64x128xf32>
    %c0 = arith.constant 0 : index
    %c0_0 = arith.constant 0 : index
    %5 = vector.load %arg1[%c0, %c0_0] : memref<1x128xf32, #tpu.memory_space<vmem>>, vector<1x128xf32>
    %6 = vector.broadcast %5 : vector<1x128xf32> to vector<64x128xf32>
    %7 = arith.mulf %4, %6 : vector<64x128xf32>
    %c0_1 = arith.constant 0 : index
    %c0_2 = arith.constant 0 : index
    %8 = vector.load %arg2[%c0_1, %c0_2] : memref<1x128xf32, #tpu.memory_space<vmem>>, vector<1x128xf32>
    %9 = vector.broadcast %8 : vector<1x128xf32> to vector<64x128xf32>
    %10 = arith.addf %7, %9 : vector<64x128xf32>
    %11 = math.sin %10 : vector<64x128xf32>
    %c0_3 = arith.constant 0 : index
    %c0_4 = arith.constant 0 : index
    %12 = vector.load %arg3[%c0_3, %c0_4] : memref<64x128xf32, #tpu.memory_space<vmem>>, vector<64x128xf32>
    tpu.vector_store %arg3[%c0_3, %c0_4], %11 {strides = array<i32>} : memref<64x128xf32, #tpu.memory_space<vmem>>, vector<64x128xf32>,
    return
  }
  func.func @transform_0(%arg0: i32) -> (i32, i32) {
    %c0_i32 = arith.constant 0 : i32
    %c0_i32_0 = arith.constant 0 : i32
    %c0_i32_1 = arith.constant 0 : i32
    return %c0_i32, %c0_i32_0 : i32, i32
  }
  func.func @transform_1(%arg0: i32) -> (i32, i32) {
    %c0_i32 = arith.constant 0 : i32
    %c0_i32_0 = arith.constant 0 : i32
    %c0_i32_1 = arith.constant 0 : i32
    return %c0_i32, %c0_i32_0 : i32, i32
  }
  func.func @transform_2(%arg0: i32) -> (i32, i32) {
    %c0_i32 = arith.constant 0 : i32
    %c0_i32_0 = arith.constant 0 : i32
    return %arg0, %c0_i32 : i32, i32
  }
}

</mosaic_0001>

<llo_original>
// kernel: tpu_custom_call.1
$region0: #{tpu_custom_call.1}
  #allocation0 [shape = 'u32[]', space=smem, size = 0x4, offset = 0x4, fixed_abs, tag = 'smem constant byte address 0x4 - core index']
  #allocation1 [shape = 'u32[72,128]{1,0:T(1,128)}', space=vmem, size = 0x9000, scoped, tag = 'internal scratch']
  %s0 = inlined_call_operand.hbm [shape: f32[1,128], index: 0, kind: input, shape index: {}]
  %s1 = inlined_call_operand.hbm [shape: f32[1,128], index: 1, kind: input, shape index: {}]
  %s2 = inlined_call_operand.hbm [shape: f32[64,128], index: 2, kind: output, shape index: {}]
  %s3 = sld [smem:[#allocation0]]
  $region26: #{tpu_custom_call.1} parent=0
    _
  %s5 = ssub.s32 1, %s3
  %s6 = scalar_select 0, %s5, %s3
  $region1: #{tpu_custom_call.1} parent=0
    #allocation2 [shape = 'u8[512]{0}', space=vmem, size = 0x400, scoped, tag = 'input window, operand 0, single buffered']
    #allocation3 [shape = 's32[1]{0}', space=sflag, size = 0x4, scoped, tag = 'scoped memory for tpu_custom_call.1']
    #allocation4 [shape = 's32[1]{0}', space=sflag, size = 0x4, scoped, tag = 'scoped memory for tpu_custom_call.1']
    #allocation5 [shape = 'u8[512]{0}', space=vmem, size = 0x400, scoped, tag = 'input window, operand 1, single buffered']
    #allocation6 [shape = 's32[1]{0}', space=sflag, size = 0x4, scoped, tag = 'scoped memory for tpu_custom_call.1']
    #allocation7 [shape = 'u8[32768]{0}', space=vmem, size = 0x8000, scoped, tag = 'output window, operand 0, single buffered']
    %7 = vsyncpa [#allocation3], 0
    %8 = vsyncpa [#allocation6], 0
    %9 = vsyncpa [#allocation4], 0
    // Predicated region
    $region2: #{tpu_custom_call.1} parent=1 // pred_check
      _
    $region3: #{tpu_custom_call.1} parent=1 // pred_check_branch
      %11 = sbr.rel (0) target = $region5
    $region4: #{tpu_custom_call.1} parent=1 // pred_region
      %13 = vsyncadd [#allocation3], 0
      %s15 = sshll.u32 %s0, 4
      %s16 = int_to_ptr.hbm [resolvable:$true] %s15
      %s17 = sshll.u32 [#allocation2], 4
      %s18 = int_to_ptr.vmem [resolvable:$true] %s17
      %20 = dma.hbm_to_vmem [thread:$0]  %s16, 16, %s18, [#allocation3]
    $region5: #{tpu_custom_call.1} parent=1 // pred_fallthru
      _
    // Predicated region
    $region6: #{tpu_custom_call.1} parent=1 // pred_check
      _
    $region7: #{tpu_custom_call.1} parent=1 // pred_check_branch
      %22 = sbr.rel (0) target = $region9
    $region8: #{tpu_custom_call.1} parent=1 // pred_region
      %24 = vsyncadd [#allocation6], 0
      %s26 = sshll.u32 %s1, 4
      %s27 = int_to_ptr.hbm [resolvable:$true] %s26
      %s28 = sshll.u32 [#allocation5], 4
      %s29 = int_to_ptr.vmem [resolvable:$true] %s28
      %31 = dma.hbm_to_vmem [thread:$0]  %s27, 16, %s29, [#allocation6]
    $region9: #{tpu_custom_call.1} parent=1 // pred_fallthru
      _
    // Predicated region
    $region10: #{tpu_custom_call.1} parent=1 // pred_check
      _
    $region11: #{tpu_custom_call.1} parent=1 // pred_check_branch
      %33 = sbr.rel (0) target = $region13
    $region12: #{tpu_custom_call.1} parent=1 // pred_region
      %35 = dma.done [#allocation3], 16
    $region13: #{tpu_custom_call.1} parent=1 // pred_fallthru
      _
    // Predicated region
    $region14: #{tpu_custom_call.1} parent=1 // pred_check
      _
    $region15: #{tpu_custom_call.1} parent=1 // pred_check_branch
      %37 = sbr.rel (0) target = $region17
    $region16: #{tpu_custom_call.1} parent=1 // pred_region
      %39 = dma.done [#allocation6], 16
    $region17: #{tpu_custom_call.1} parent=1 // pred_fallthru
      _
    %v40 = vlaneseq
    %v41 = vshrl.u32 %v40, 7
    %v42 = vadd.s32 %v41, 8
    %v43 = vadd.s32 %v41, 16
    %v44 = vadd.s32 %v41, 24
    %v45 = vadd.s32 %v41, 32
    %v46 = vadd.s32 %v41, 40
    %v47 = vadd.s32 %v41, 48
    %v48 = vadd.s32 %v41, 56
    %s49 = smul.u32 0, 64
    %v50 = vstv %s49
    %v51 = vadd.s32 %v41, %v50
    %v52 = vadd.s32 %v42, %v50
    %v53 = vadd.s32 %v43, %v50
    %v54 = vadd.s32 %v44, %v50
    %v55 = vadd.s32 %v45, %v50
    %v56 = vadd.s32 %v46, %v50
    %v57 = vadd.s32 %v47, %v50
    %v58 = vadd.s32 %v48, %v50
    %v59 = vcvt.s32.f32 %v51
    %v60 = vcvt.s32.f32 %v52
    %v61 = vcvt.s32.f32 %v53
    %v62 = vcvt.s32.f32 %v54
    %v63 = vcvt.s32.f32 %v55
    %v64 = vcvt.s32.f32 %v56
    %v65 = vcvt.s32.f32 %v57
    %v66 = vcvt.s32.f32 %v58
    %v67 = vld [vmem:[#allocation2] sm:$0x1]
    %v69 = vperm.slane %v67, 0
    %v71 = vmul.f32 %v59, %v69
    %v72 = vmul.f32 %v60, %v69
    %v73 = vmul.f32 %v61, %v69
    %v74 = vmul.f32 %v62, %v69
    %v75 = vmul.f32 %v63, %v69
    %v76 = vmul.f32 %v64, %v69
    %v77 = vmul.f32 %v65, %v69
    %v78 = vmul.f32 %v66, %v69
    %v79 = vld [vmem:[#allocation5] sm:$0x1]
    %v81 = vperm.slane %v79, 0
    %v83 = vadd.f32 %v71, %v81
    %v84 = vadd.f32 %v72, %v81
    %v85 = vadd.f32 %v73, %v81
    %v86 = vadd.f32 %v74, %v81
    %v87 = vadd.f32 %v75, %v81
    %v88 = vadd.f32 %v76, %v81
    %v89 = vadd.f32 %v77, %v81
    %v90 = vadd.f32 %v78, %v81
    %v91 = vand.u32 2147483647, %v83
    %vm92 = vcmp.le.f32.partialorder %v91, 0.7853982
    %vm93 = vcmp.lt.s32.totalorder %v83, 0
    %v94 = vand.u32 %v83, 2139095040
    %v95 = vshrl.u32 %v94, 23
    %v96 = vsub.s32 %v95, 127
    %v97 = vand.u32 2147483647, %v83
    %v98 = vand.u32 %v97, 8388607
    %v99 = vor.u32 %v98, 8388608
    %v100 = vsub.s32 0, %v99
    %v101 = vadd.s32 %v96, 1
    %vm102 = vcmp.gt.s32.totalorder %v101, 0
    %v103 = vsel %vm102, %v101, 0
    %v104 = vshrl.u32 %v103, 5
    %v105 = vand.u32 %v103, 31
    %v106 = vsub.s32 32, %v105
    %v107 = vshrl.u32 683565275, %v106
    %v108 = vshll.u32 683565275, %v105
    %v109 = vshrl.u32 2475754826, %v106
    %v110 = vor.u32 %v108, %v109
    %v111 = vshll.u32 2475754826, %v105
    %v112 = vshrl.u32 2131351028, %v106
    %v113 = vor.u32 %v111, %v112
    %v114 = vshll.u32 2131351028, %v105
    %v115 = vshrl.u32 2102212464, %v106
    %v116 = vor.u32 %v114, %v115
    %v117 = vshll.u32 2102212464, %v105
    %v118 = vshrl.u32 920167782, %v106
    %v119 = vor.u32 %v117, %v118
    %v120 = vshll.u32 920167782, %v105
    %v121 = vshrl.u32 1326507024, %v106
    %v122 = vor.u32 %v120, %v121
    %vm123 = vcmp.lt.s32.totalorder %v104, 1
    %vm124 = vcmp.lt.s32.totalorder %v104, 2
    %vm125 = vcmp.lt.s32.totalorder %v104, 3
    %vm126 = vcmp.lt.s32.totalorder %v104, 4
    %v127 = vsel %vm123, %v107, %v110
    %v128 = vsel %vm126, %v116, 2102212464
    %v129 = vsel %vm125, %v113, %v128
    %v130 = vsel %vm124, %v127, %v129
    %v131 = vsel %vm123, %v110, %v113
    %v132 = vsel %vm126, %v119, 920167782
    %v133 = vsel %vm125, %v116, %v132
    %v134 = vsel %vm124, %v131, %v133
    %v135 = vsel %vm123, %v113, %v116
    %v136 = vsel %vm126, %v122, 1326507024
    %v137 = vsel %vm125, %v119, %v136
    %v138 = vsel %vm124, %v135, %v137
    %v139 = vshll.u32 %v99, 8
    %v140 = vand.u32 %v139, 65535
    %v141 = vshrl.u32 %v139, 16
    %v142 = vand.u32 %v138, 65535
    %v143 = vshrl.u32 %v138, 16
    %v144 = vmul.u32 %v140, %v142
    %v145 = vmul.u32 %v140, %v143
    %v146 = vmul.u32 %v141, %v142
    %v147 = vmul.u32 %v141, %v143
    %v148 = vshll.u32 %v145, 16
    %v149 = vshrl.u32 %v145, 16
    %v150 = vshll.u32 %v146, 16
    %v151 = vshrl.u32 %v146, 16
    %vm152 = vc.u32 %v144, %v148
    %v153 = vsel %vm152, 1, 0
    %v154 = vadd.s32 %v144, %v148
    %v155 = vadd.s32 %v147, %v153
    %vm156 = vc.u32 %v154, %v150
    %v157 = vsel %vm156, 1, 0
    %v158 = vadd.s32 %v154, %v150
    %v159 = vadd.s32 %v155, %v157
    %v160 = vadd.s32 %v159, %v149
    %v161 = vadd.s32 %v160, %v151
    %v162 = vand.u32 %v139, 65535
    %v163 = vshrl.u32 %v139, 16
    %v164 = vand.u32 %v134, 65535
    %v165 = vshrl.u32 %v134, 16
    %v166 = vmul.u32 %v162, %v164
    %v167 = vmul.u32 %v162, %v165
    %v168 = vmul.u32 %v163, %v164
    %v169 = vmul.u32 %v163, %v165
    %v170 = vshll.u32 %v167, 16
    %v171 = vshrl.u32 %v167, 16
    %v172 = vshll.u32 %v168, 16
    %v173 = vshrl.u32 %v168, 16
    %vm174 = vc.u32 %v166, %v170
    %v175 = vsel %vm174, 1, 0
    %v176 = vadd.s32 %v166, %v170
    %v177 = vadd.s32 %v169, %v175
    %vm178 = vc.u32 %v176, %v172
    %v179 = vsel %vm178, 1, 0
    %v180 = vadd.s32 %v176, %v172
    %v181 = vadd.s32 %v177, %v179
    %v182 = vadd.s32 %v181, %v171
    %v183 = vadd.s32 %v182, %v173
    %v184 = vmul.u32 %v139, %v130
    %v185 = vadd.s32 %v161, %v180
    %vm186 = vc.u32 %v161, %v180
    %v187 = vadd.s32 %v183, 1
    %v188 = vsel %vm186, %v187, %v183
    %v189 = vadd.s32 %v184, %v188
    %v190 = vadd.s32 %v189, 536870912
    %v191 = vshrl.u32 %v190, 30
    %v192 = vshll.u32 %v191, 30
    %v193 = vsub.s32 %v189, %v192
    %vm194 = vcmp.lt.s32.totalorder %v193, 0
    %v195 = vsub.s32 0, %v193
    %v196 = vsel %vm194, %v195, %v193
    %v197 = vclz %v196
    %v198 = vsub.s32 %v197, 2
    %vm199 = vcmp.gt.s32.totalorder 0, %v198
    %v200 = vsel %vm199, 0, %v198
    %v201 = vsub.s32 32, %v200
    %v202 = vshll.u32 %v193, %v200
    %v203 = vshrl.u32 %v185, %v201
    %v204 = vor.u32 %v202, %v203
    %v205 = vsub.s32 4294967266, %v200
    %v206 = vadd.s32 %v205, 127
    %v207 = vshll.u32 %v206, 23
    %v208 = vor.u32 4788187, %v207
    %v209 = vand.u32 2147483647, %v208
    %v211 = vcvt.s32.f32 %v204
    %v212 = vmul.f32 %v211, %v209
    %v213 = vxor.u32 %v212, 2147483648
    %v214 = vsel %vm93, %v213, %v212
    %v215 = vsub.s32 4, %v191
    %v216 = vsel %vm93, %v215, %v191
    %v217 = vsel %vm92, %v83, %v214
    %v218 = vsel %vm92, 0, %v216
    %v219 = vmul.f32 %v217, %v217
    %v220 = vmul.f32 %v219, -0.001358992
    %v221 = vadd.f32 %v220, 0.041655596
    %v222 = vmul.f32 %v219, %v221
    %v223 = vadd.f32 %v222, -0.4999988
    %v224 = vmul.f32 %v219, %v223
    %v225 = vadd.f32 1.0, %v224
    %v226 = vmul.f32 %v217, %v217
    %v227 = vmul.f32 %v226, -0.00019511016
    %v228 = vadd.f32 %v227, 0.008332121
    %v229 = vmul.f32 %v226, %v228
    %v230 = vadd.f32 %v229, -0.16666654
    %v231 = vmul.f32 %v226, %v230
    %v232 = vadd.f32 %v231, 1.0
    %v233 = vmul.f32 %v232, %v217
    %vm234 = vweird.f32 %v83
    %v235 = vadd.s32 %v218, 3
    %v236 = vand.u32 %v235, 3
    %vm237 = vcmp.lt.s32.totalorder %v236, 2
    %vm238 = vcmp.eq.s32.totalorder %v236, 0
    %v239 = vxor.u32 %v233, 2147483648
    %v240 = vsel %vm238, %v225, %v239
    %vm241 = vcmp.eq.s32.totalorder %v236, 2
    %v242 = vxor.u32 %v225, 2147483648
    %v243 = vsel %vm241, %v242, %v233
    %v244 = vsel %vm237, %v240, %v243
    %v245 = vsel %vm234, nan, %v244
    %v246 = vand.u32 2147483647, %v84
    %vm247 = vcmp.le.f32.partialorder %v246, 0.7853982
    %vm248 = vcmp.lt.s32.totalorder %v84, 0
    %v249 = vand.u32 %v84, 2139095040
    %v250 = vshrl.u32 %v249, 23
    %v251 = vsub.s32 %v250, 127
    %v252 = vand.u32 2147483647, %v84
    %v253 = vand.u32 %v252, 8388607
    %v254 = vor.u32 %v253, 8388608
    %v255 = vsub.s32 0, %v254
    %v256 = vadd.s32 %v251, 1
    %vm257 = vcmp.gt.s32.totalorder %v256, 0
    %v258 = vsel %vm257, %v256, 0
    %v259 = vshrl.u32 %v258, 5
    %v260 = vand.u32 %v258, 31
    %v261 = vsub.s32 32, %v260
    %v262 = vshrl.u32 683565275, %v261
    %v263 = vshll.u32 683565275, %v260
    %v264 = vshrl.u32 2475754826, %v261
    %v265 = vor.u32 %v263, %v264
    %v266 = vshll.u32 2475754826, %v260
    %v267 = vshrl.u32 2131351028, %v261
    %v268 = vor.u32 %v266, %v267
    %v269 = vshll.u32 2131351028, %v260
    %v270 = vshrl.u32 2102212464, %v261
    %v271 = vor.u32 %v269, %v270
    %v272 = vshll.u32 2102212464, %v260
    %v273 = vshrl.u32 920167782, %v261
    %v274 = vor.u32 %v272, %v273
    %v275 = vshll.u32 920167782, %v260
    %v276 = vshrl.u32 1326507024, %v261
    %v277 = vor.u32 %v275, %v276
    %vm278 = vcmp.lt.s32.totalorder %v259, 1
    %vm279 = vcmp.lt.s32.totalorder %v259, 2
    %vm280 = vcmp.lt.s32.totalorder %v259, 3
    %vm281 = vcmp.lt.s32.totalorder %v259, 4
    %v282 = vsel %vm278, %v262, %v265
    %v283 = vsel %vm281, %v271, 2102212464
    %v284 = vsel %vm280, %v268, %v283
    %v285 = vsel %vm279, %v282, %v284
    %v286 = vsel %vm278, %v265, %v268
    %v287 = vsel %vm281, %v274, 920167782
    %v288 = vsel %vm280, %v271, %v287
    %v289 = vsel %vm279, %v286, %v288
    %v290 = vsel %vm278, %v268, %v271
    %v291 = vsel %vm281, %v277, 1326507024
    %v292 = vsel %vm280, %v274, %v291
    %v293 = vsel %vm279, %v290, %v292
    %v294 = vshll.u32 %v254, 8
    %v295 = vand.u32 %v294, 65535
    %v296 = vshrl.u32 %v294, 16
    %v297 = vand.u32 %v293, 65535
    %v298 = vshrl.u32 %v293, 16
    %v299 = vmul.u32 %v295, %v297
    %v300 = vmul.u32 %v295, %v298
    %v301 = vmul.u32 %v296, %v297
    %v302 = vmul.u32 %v296, %v298
    %v303 = vshll.u32 %v300, 16
    %v304 = vshrl.u32 %v300, 16
    %v305 = vshll.u32 %v301, 16
    %v306 = vshrl.u32 %v301, 16
    %vm307 = vc.u32 %v299, %v303
    %v308 = vsel %vm307, 1, 0
    %v309 = vadd.s32 %v299, %v303
    %v310 = vadd.s32 %v302, %v308
    %vm311 = vc.u32 %v309, %v305
    %v312 = vsel %vm311, 1, 0
    %v313 = vadd.s32 %v309, %v305
    %v314 = vadd.s32 %v310, %v312
    %v315 = vadd.s32 %v314, %v304
    %v316 = vadd.s32 %v315, %v306
    %v317 = vand.u32 %v294, 65535
    %v318 = vshrl.u32 %v294, 16
    %v319 = vand.u32 %v289, 65535
    %v320 = vshrl.u32 %v289, 16
    %v321 = vmul.u32 %v317, %v319
    %v322 = vmul.u32 %v317, %v320
    %v323 = vmul.u32 %v318, %v319
    %v324 = vmul.u32 %v318, %v320
    %v325 = vshll.u32 %v322, 16
    %v326 = vshrl.u32 %v322, 16
    %v327 = vshll.u32 %v323, 16
    %v328 = vshrl.u32 %v323, 16
    %vm329 = vc.u32 %v321, %v325
    %v330 = vsel %vm329, 1, 0
    %v331 = vadd.s32 %v321, %v325
    %v332 = vadd.s32 %v324, %v330
    %vm333 = vc.u32 %v331, %v327
    %v334 = vsel %vm333, 1, 0
    %v335 = vadd.s32 %v331, %v327
    %v336 = vadd.s32 %v332, %v334
    %v337 = vadd.s32 %v336, %v326
    %v338 = vadd.s32 %v337, %v328
    %v339 = vmul.u32 %v294, %v285
    %v340 = vadd.s32 %v316, %v335
    %vm341 = vc.u32 %v316, %v335
    %v342 = vadd.s32 %v338, 1
    %v343 = vsel %vm341, %v342, %v338
    %v344 = vadd.s32 %v339, %v343
    %v345 = vadd.s32 %v344, 536870912
    %v346 = vshrl.u32 %v345, 30
    %v347 = vshll.u32 %v346, 30
    %v348 = vsub.s32 %v344, %v347
    %vm349 = vcmp.lt.s32.totalorder %v348, 0
    %v350 = vsub.s32 0, %v348
    %v351 = vsel %vm349, %v350, %v348
    %v352 = vclz %v351
    %v353 = vsub.s32 %v352, 2
    %vm354 = vcmp.gt.s32.totalorder 0, %v353
    %v355 = vsel %vm354, 0, %v353
    %v356 = vsub.s32 32, %v355
    %v357 = vshll.u32 %v348, %v355
    %v358 = vshrl.u32 %v340, %v356
    %v359 = vor.u32 %v357, %v358
    %v360 = vsub.s32 4294967266, %v355
    %v361 = vadd.s32 %v360, 127
    %v362 = vshll.u32 %v361, 23
    %v363 = vor.u32 4788187, %v362
    %v364 = vand.u32 2147483647, %v363
    %v366 = vcvt.s32.f32 %v359
    %v367 = vmul.f32 %v366, %v364
    %v368 = vxor.u32 %v367, 2147483648
    %v369 = vsel %vm248, %v368, %v367
    %v370 = vsub.s32 4, %v346
    %v371 = vsel %vm248, %v370, %v346
    %v372 = vsel %vm247, %v84, %v369
    %v373 = vsel %vm247, 0, %v371
    %v374 = vmul.f32 %v372, %v372
    %v375 = vmul.f32 %v374, -0.001358992
    %v376 = vadd.f32 %v375, 0.041655596
    %v377 = vmul.f32 %v374, %v376
    %v378 = vadd.f32 %v377, -0.4999988
    %v379 = vmul.f32 %v374, %v378
    %v380 = vadd.f32 1.0, %v379
    %v381 = vmul.f32 %v372, %v372
    %v382 = vmul.f32 %v381, -0.00019511016
    %v383 = vadd.f32 %v382, 0.008332121
    %v384 = vmul.f32 %v381, %v383
    %v385 = vadd.f32 %v384, -0.16666654
    %v386 = vmul.f32 %v381, %v385
    %v387 = vadd.f32 %v386, 1.0
    %v388 = vmul.f32 %v387, %v372
    %vm389 = vweird.f32 %v84
    %v390 = vadd.s32 %v373, 3
    %v391 = vand.u32 %v390, 3
    %vm392 = vcmp.lt.s32.totalorder %v391, 2
    %vm393 = vcmp.eq.s32.totalorder %v391, 0
    %v394 = vxor.u32 %v388, 2147483648
    %v395 = vsel %vm393, %v380, %v394
    %vm396 = vcmp.eq.s32.totalorder %v391, 2
    %v397 = vxor.u32 %v380, 2147483648
    %v398 = vsel %vm396, %v397, %v388
    %v399 = vsel %vm392, %v395, %v398
    %v400 = vsel %vm389, nan, %v399
    %v401 = vand.u32 2147483647, %v85
    %vm402 = vcmp.le.f32.partialorder %v401, 0.7853982
    %vm403 = vcmp.lt.s32.totalorder %v85, 0
    %v404 = vand.u32 %v85, 2139095040
    %v405 = vshrl.u32 %v404, 23
    %v406 = vsub.s32 %v405, 127
    %v407 = vand.u32 2147483647, %v85
    %v408 = vand.u32 %v407, 8388607
    %v409 = vor.u32 %v408, 8388608
    %v410 = vsub.s32 0, %v409
    %v411 = vadd.s32 %v406, 1
    %vm412 = vcmp.gt.s32.totalorder %v411, 0
    %v413 = vsel %vm412, %v411, 0
    %v414 = vshrl.u32 %v413, 5
    %v415 = vand.u32 %v413, 31
    %v416 = vsub.s32 32, %v415
    %v417 = vshrl.u32 683565275, %v416
    %v418 = vshll.u32 683565275, %v415
    %v419 = vshrl.u32 2475754826, %v416
    %v420 = vor.u32 %v418, %v419
    %v421 = vshll.u32 2475754826, %v415
    %v422 = vshrl.u32 2131351028, %v416
    %v423 = vor.u32 %v421, %v422
    %v424 = vshll.u32 2131351028, %v415
    %v425 = vshrl.u32 2102212464, %v416
    %v426 = vor.u32 %v424, %v425
    %v427 = vshll.u32 2102212464, %v415
    %v428 = vshrl.u32 920167782, %v416
    %v429 = vor.u32 %v427, %v428
    %v430 = vshll.u32 920167782, %v415
    %v431 = vshrl.u32 1326507024, %v416
    %v432 = vor.u32 %v430, %v431
    %vm433 = vcmp.lt.s32.totalorder %v414, 1
    %vm434 = vcmp.lt.s32.totalorder %v414, 2
    %vm435 = vcmp.lt.s32.totalorder %v414, 3
    %vm436 = vcmp.lt.s32.totalorder %v414, 4
    %v437 = vsel %vm433, %v417, %v420
    %v438 = vsel %vm436, %v426, 2102212464
    %v439 = vsel %vm435, %v423, %v438
    %v440 = vsel %vm434, %v437, %v439
    %v441 = vsel %vm433, %v420, %v423
    %v442 = vsel %vm436, %v429, 920167782
    %v443 = vsel %vm435, %v426, %v442
    %v444 = vsel %vm434, %v441, %v443
    %v445 = vsel %vm433, %v423, %v426
    %v446 = vsel %vm436, %v432, 1326507024
    %v447 = vsel %vm435, %v429, %v446
    %v448 = vsel %vm434, %v445, %v447
    %v449 = vshll.u32 %v409, 8
    %v450 = vand.u32 %v449, 65535
    %v451 = vshrl.u32 %v449, 16
    %v452 = vand.u32 %v448, 65535
    %v453 = vshrl.u32 %v448, 16
    %v454 = vmul.u32 %v450, %v452
    %v455 = vmul.u32 %v450, %v453
    %v456 = vmul.u32 %v451, %v452
    %v457 = vmul.u32 %v451, %v453
    %v458 = vshll.u32 %v455, 16
    %v459 = vshrl.u32 %v455, 16
    %v460 = vshll.u32 %v456, 16
    %v461 = vshrl.u32 %v456, 16
    %vm462 = vc.u32 %v454, %v458
    %v463 = vsel %vm462, 1, 0
    %v464 = vadd.s32 %v454, %v458
    %v465 = vadd.s32 %v457, %v463
    %vm466 = vc.u32 %v464, %v460
    %v467 = vsel %vm466, 1, 0
    %v468 = vadd.s32 %v464, %v460
    %v469 = vadd.s32 %v465, %v467
    %v470 = vadd.s32 %v469, %v459
    %v471 = vadd.s32 %v470, %v461
    %v472 = vand.u32 %v449, 65535
    %v473 = vshrl.u32 %v449, 16
    %v474 = vand.u32 %v444, 65535
    %v475 = vshrl.u32 %v444, 16
    %v476 = vmul.u32 %v472, %v474
    %v477 = vmul.u32 %v472, %v475
    %v478 = vmul.u32 %v473, %v474
    %v479 = vmul.u32 %v473, %v475
    %v480 = vshll.u32 %v477, 16
    %v481 = vshrl.u32 %v477, 16
    %v482 = vshll.u32 %v478, 16
    %v483 = vshrl.u32 %v478, 16
    %vm484 = vc.u32 %v476, %v480
    %v485 = vsel %vm484, 1, 0
    %v486 = vadd.s32 %v476, %v480
    %v487 = vadd.s32 %v479, %v485
    %vm488 = vc.u32 %v486, %v482
    %v489 = vsel %vm488, 1, 0
    %v490 = vadd.s32 %v486, %v482
    %v491 = vadd.s32 %v487, %v489
    %v492 = vadd.s32 %v491, %v481
    %v493 = vadd.s32 %v492, %v483
    %v494 = vmul.u32 %v449, %v440
    %v495 = vadd.s32 %v471, %v490
    %vm496 = vc.u32 %v471, %v490
    %v497 = vadd.s32 %v493, 1
    %v498 = vsel %vm496, %v497, %v493
    %v499 = vadd.s32 %v494, %v498
    %v500 = vadd.s32 %v499, 536870912
    %v501 = vshrl.u32 %v500, 30
    %v502 = vshll.u32 %v501, 30
    %v503 = vsub.s32 %v499, %v502
    %vm504 = vcmp.lt.s32.totalorder %v503, 0
    %v505 = vsub.s32 0, %v503
    %v506 = vsel %vm504, %v505, %v503
    %v507 = vclz %v506
    %v508 = vsub.s32 %v507, 2
    %vm509 = vcmp.gt.s32.totalorder 0, %v508
    %v510 = vsel %vm509, 0, %v508
    %v511 = vsub.s32 32, %v510
    %v512 = vshll.u32 %v503, %v510
    %v513 = vshrl.u32 %v495, %v511
    %v514 = vor.u32 %v512, %v513
    %v515 = vsub.s32 4294967266, %v510
    %v516 = vadd.s32 %v515, 127
    %v517 = vshll.u32 %v516, 23
    %v518 = vor.u32 4788187, %v517
    %v519 = vand.u32 2147483647, %v518
    %v521 = vcvt.s32.f32 %v514
    %v522 = vmul.f32 %v521, %v519
    %v523 = vxor.u32 %v522, 2147483648
    %v524 = vsel %vm403, %v523, %v522
    %v525 = vsub.s32 4, %v501
    %v526 = vsel %vm403, %v525, %v501
    %v527 = vsel %vm402, %v85, %v524
    %v528 = vsel %vm402, 0, %v526
    %v529 = vmul.f32 %v527, %v527
    %v530 = vmul.f32 %v529, -0.001358992
    %v531 = vadd.f32 %v530, 0.041655596
    %v532 = vmul.f32 %v529, %v531
    %v533 = vadd.f32 %v532, -0.4999988
    %v534 = vmul.f32 %v529, %v533
    %v535 = vadd.f32 1.0, %v534
    %v536 = vmul.f32 %v527, %v527
    %v537 = vmul.f32 %v536, -0.00019511016
    %v538 = vadd.f32 %v537, 0.008332121
    %v539 = vmul.f32 %v536, %v538
    %v540 = vadd.f32 %v539, -0.16666654
    %v541 = vmul.f32 %v536, %v540
    %v542 = vadd.f32 %v541, 1.0
    %v543 = vmul.f32 %v542, %v527
    %vm544 = vweird.f32 %v85
    %v545 = vadd.s32 %v528, 3
    %v546 = vand.u32 %v545, 3
    %vm547 = vcmp.lt.s32.totalorder %v546, 2
    %vm548 = vcmp.eq.s32.totalorder %v546, 0
    %v549 = vxor.u32 %v543, 2147483648
    %v550 = vsel %vm548, %v535, %v549
    %vm551 = vcmp.eq.s32.totalorder %v546, 2
    %v552 = vxor.u32 %v535, 2147483648
    %v553 = vsel %vm551, %v552, %v543
    %v554 = vsel %vm547, %v550, %v553
    %v555 = vsel %vm544, nan, %v554
    %v556 = vand.u32 2147483647, %v86
    %vm557 = vcmp.le.f32.partialorder %v556, 0.7853982
    %vm558 = vcmp.lt.s32.totalorder %v86, 0
    %v559 = vand.u32 %v86, 2139095040
    %v560 = vshrl.u32 %v559, 23
    %v561 = vsub.s32 %v560, 127
    %v562 = vand.u32 2147483647, %v86
    %v563 = vand.u32 %v562, 8388607
    %v564 = vor.u32 %v563, 8388608
    %v565 = vsub.s32 0, %v564
    %v566 = vadd.s32 %v561, 1
    %vm567 = vcmp.gt.s32.totalorder %v566, 0
    %v568 = vsel %vm567, %v566, 0
    %v569 = vshrl.u32 %v568, 5
    %v570 = vand.u32 %v568, 31
    %v571 = vsub.s32 32, %v570
    %v572 = vshrl.u32 683565275, %v571
    %v573 = vshll.u32 683565275, %v570
    %v574 = vshrl.u32 2475754826, %v571
    %v575 = vor.u32 %v573, %v574
    %v576 = vshll.u32 2475754826, %v570
    %v577 = vshrl.u32 2131351028, %v571
    %v578 = vor.u32 %v576, %v577
    %v579 = vshll.u32 2131351028, %v570
    %v580 = vshrl.u32 2102212464, %v571
    %v581 = vor.u32 %v579, %v580
    %v582 = vshll.u32 2102212464, %v570
    %v583 = vshrl.u32 920167782, %v571
    %v584 = vor.u32 %v582, %v583
    %v585 = vshll.u32 920167782, %v570
    %v586 = vshrl.u32 1326507024, %v571
    %v587 = vor.u32 %v585, %v586
    %vm588 = vcmp.lt.s32.totalorder %v569, 1
    %vm589 = vcmp.lt.s32.totalorder %v569, 2
    %vm590 = vcmp.lt.s32.totalorder %v569, 3
    %vm591 = vcmp.lt.s32.totalorder %v569, 4
    %v592 = vsel %vm588, %v572, %v575
    %v593 = vsel %vm591, %v581, 2102212464
    %v594 = vsel %vm590, %v578, %v593
    %v595 = vsel %vm589, %v592, %v594
    %v596 = vsel %vm588, %v575, %v578
    %v597 = vsel %vm591, %v584, 920167782
    %v598 = vsel %vm590, %v581, %v597
    %v599 = vsel %vm589, %v596, %v598
    %v600 = vsel %vm588, %v578, %v581
    %v601 = vsel %vm591, %v587, 1326507024
    %v602 = vsel %vm590, %v584, %v601
    %v603 = vsel %vm589, %v600, %v602
    %v604 = vshll.u32 %v564, 8
    %v605 = vand.u32 %v604, 65535
    %v606 = vshrl.u32 %v604, 16
    %v607 = vand.u32 %v603, 65535
    %v608 = vshrl.u32 %v603, 16
    %v609 = vmul.u32 %v605, %v607
    %v610 = vmul.u32 %v605, %v608
    %v611 = vmul.u32 %v606, %v607
    %v612 = vmul.u32 %v606, %v608
    %v613 = vshll.u32 %v610, 16
    %v614 = vshrl.u32 %v610, 16
    %v615 = vshll.u32 %v611, 16
    %v616 = vshrl.u32 %v611, 16
    %vm617 = vc.u32 %v609, %v613
    %v618 = vsel %vm617, 1, 0
    %v619 = vadd.s32 %v609, %v613
    %v620 = vadd.s32 %v612, %v618
    %vm621 = vc.u32 %v619, %v615
    %v622 = vsel %vm621, 1, 0
    %v623 = vadd.s32 %v619, %v615
    %v624 = vadd.s32 %v620, %v622
    %v625 = vadd.s32 %v624, %v614
    %v626 = vadd.s32 %v625, %v616
    %v627 = vand.u32 %v604, 65535
    %v628 = vshrl.u32 %v604, 16
    %v629 = vand.u32 %v599, 65535
    %v630 = vshrl.u32 %v599, 16
    %v631 = vmul.u32 %v627, %v629
    %v632 = vmul.u32 %v627, %v630
    %v633 = vmul.u32 %v628, %v629
    %v634 = vmul.u32 %v628, %v630
    %v635 = vshll.u32 %v632, 16
    %v636 = vshrl.u32 %v632, 16
    %v637 = vshll.u32 %v633, 16
    %v638 = vshrl.u32 %v633, 16
    %vm639 = vc.u32 %v631, %v635
    %v640 = vsel %vm639, 1, 0
    %v641 = vadd.s32 %v631, %v635
    %v642 = vadd.s32 %v634, %v640
    %vm643 = vc.u32 %v641, %v637
    %v644 = vsel %vm643, 1, 0
    %v645 = vadd.s32 %v641, %v637
    %v646 = vadd.s32 %v642, %v644
    %v647 = vadd.s32 %v646, %v636
    %v648 = vadd.s32 %v647, %v638
    %v649 = vmul.u32 %v604, %v595
    %v650 = vadd.s32 %v626, %v645
    %vm651 = vc.u32 %v626, %v645
    %v652 = vadd.s32 %v648, 1
    %v653 = vsel %vm651, %v652, %v648
    %v654 = vadd.s32 %v649, %v653
    %v655 = vadd.s32 %v654, 536870912
    %v656 = vshrl.u32 %v655, 30
    %v657 = vshll.u32 %v656, 30
    %v658 = vsub.s32 %v654, %v657
    %vm659 = vcmp.lt.s32.totalorder %v658, 0
    %v660 = vsub.s32 0, %v658
    %v661 = vsel %vm659, %v660, %v658
    %v662 = vclz %v661
    %v663 = vsub.s32 %v662, 2
    %vm664 = vcmp.gt.s32.totalorder 0, %v663
    %v665 = vsel %vm664, 0, %v663
    %v666 = vsub.s32 32, %v665
    %v667 = vshll.u32 %v658, %v665
    %v668 = vshrl.u32 %v650, %v666
    %v669 = vor.u32 %v667, %v668
    %v670 = vsub.s32 4294967266, %v665
    %v671 = vadd.s32 %v670, 127
    %v672 = vshll.u32 %v671, 23
    %v673 = vor.u32 4788187, %v672
    %v674 = vand.u32 2147483647, %v673
    %v676 = vcvt.s32.f32 %v669
    %v677 = vmul.f32 %v676, %v674
    %v678 = vxor.u32 %v677, 2147483648
    %v679 = vsel %vm558, %v678, %v677
    %v680 = vsub.s32 4, %v656
    %v681 = vsel %vm558, %v680, %v656
    %v682 = vsel %vm557, %v86, %v679
    %v683 = vsel %vm557, 0, %v681
    %v684 = vmul.f32 %v682, %v682
    %v685 = vmul.f32 %v684, -0.001358992
    %v686 = vadd.f32 %v685, 0.041655596
    %v687 = vmul.f32 %v684, %v686
    %v688 = vadd.f32 %v687, -0.4999988
    %v689 = vmul.f32 %v684, %v688
    %v690 = vadd.f32 1.0, %v689
    %v691 = vmul.f32 %v682, %v682
    %v692 = vmul.f32 %v691, -0.00019511016
    %v693 = vadd.f32 %v692, 0.008332121
    %v694 = vmul.f32 %v691, %v693
    %v695 = vadd.f32 %v694, -0.16666654
    %v696 = vmul.f32 %v691, %v695
    %v697 = vadd.f32 %v696, 1.0
    %v698 = vmul.f32 %v697, %v682
    %vm699 = vweird.f32 %v86
    %v700 = vadd.s32 %v683, 3
    %v701 = vand.u32 %v700, 3
    %vm702 = vcmp.lt.s32.totalorder %v701, 2
    %vm703 = vcmp.eq.s32.totalorder %v701, 0
    %v704 = vxor.u32 %v698, 2147483648
    %v705 = vsel %vm703, %v690, %v704
    %vm706 = vcmp.eq.s32.totalorder %v701, 2
    %v707 = vxor.u32 %v690, 2147483648
    %v708 = vsel %vm706, %v707, %v698
    %v709 = vsel %vm702, %v705, %v708
    %v710 = vsel %vm699, nan, %v709
    %v711 = vand.u32 2147483647, %v87
    %vm712 = vcmp.le.f32.partialorder %v711, 0.7853982
    %vm713 = vcmp.lt.s32.totalorder %v87, 0
    %v714 = vand.u32 %v87, 2139095040
    %v715 = vshrl.u32 %v714, 23
    %v716 = vsub.s32 %v715, 127
    %v717 = vand.u32 2147483647, %v87
    %v718 = vand.u32 %v717, 8388607
    %v719 = vor.u32 %v718, 8388608
    %v720 = vsub.s32 0, %v719
    %v721 = vadd.s32 %v716, 1
    %vm722 = vcmp.gt.s32.totalorder %v721, 0
    %v723 = vsel %vm722, %v721, 0
    %v724 = vshrl.u32 %v723, 5
    %v725 = vand.u32 %v723, 31
    %v726 = vsub.s32 32, %v725
    %v727 = vshrl.u32 683565275, %v726
    %v728 = vshll.u32 683565275, %v725
    %v729 = vshrl.u32 2475754826, %v726
    %v730 = vor.u32 %v728, %v729
    %v731 = vshll.u32 2475754826, %v725
    %v732 = vshrl.u32 2131351028, %v726
    %v733 = vor.u32 %v731, %v732
    %v734 = vshll.u32 2131351028, %v725
    %v735 = vshrl.u32 2102212464, %v726
    %v736 = vor.u32 %v734, %v735
    %v737 = vshll.u32 2102212464, %v725
    %v738 = vshrl.u32 920167782, %v726
    %v739 = vor.u32 %v737, %v738
    %v740 = vshll.u32 920167782, %v725
    %v741 = vshrl.u32 1326507024, %v726
    %v742 = vor.u32 %v740, %v741
    %vm743 = vcmp.lt.s32.totalorder %v724, 1
    %vm744 = vcmp.lt.s32.totalorder %v724, 2
    %vm745 = vcmp.lt.s32.totalorder %v724, 3
    %vm746 = vcmp.lt.s32.totalorder %v724, 4
    %v747 = vsel %vm743, %v727, %v730
    %v748 = vsel %vm746, %v736, 2102212464
    %v749 = vsel %vm745, %v733, %v748
    %v750 = vsel %vm744, %v747, %v749
    %v751 = vsel %vm743, %v730, %v733
    %v752 = vsel %vm746, %v739, 920167782
    %v753 = vsel %vm745, %v736, %v752
    %v754 = vsel %vm744, %v751, %v753
    %v755 = vsel %vm743, %v733, %v736
    %v756 = vsel %vm746, %v742, 1326507024
    %v757 = vsel %vm745, %v739, %v756
    %v758 = vsel %vm744, %v755, %v757
    %v759 = vshll.u32 %v719, 8
    %v760 = vand.u32 %v759, 65535
    %v761 = vshrl.u32 %v759, 16
    %v762 = vand.u32 %v758, 65535
    %v763 = vshrl.u32 %v758, 16
    %v764 = vmul.u32 %v760, %v762
    %v765 = vmul.u32 %v760, %v763
    %v766 = vmul.u32 %v761, %v762
    %v767 = vmul.u32 %v761, %v763
    %v768 = vshll.u32 %v765, 16
    %v769 = vshrl.u32 %v765, 16
    %v770 = vshll.u32 %v766, 16
    %v771 = vshrl.u32 %v766, 16
    %vm772 = vc.u32 %v764, %v768
    %v773 = vsel %vm772, 1, 0
    %v774 = vadd.s32 %v764, %v768
    %v775 = vadd.s32 %v767, %v773
    %vm776 = vc.u32 %v774, %v770
    %v777 = vsel %vm776, 1, 0
    %v778 = vadd.s32 %v774, %v770
    %v779 = vadd.s32 %v775, %v777
    %v780 = vadd.s32 %v779, %v769
    %v781 = vadd.s32 %v780, %v771
    %v782 = vand.u32 %v759, 65535
    %v783 = vshrl.u32 %v759, 16
    %v784 = vand.u32 %v754, 65535
    %v785 = vshrl.u32 %v754, 16
    %v786 = vmul.u32 %v782, %v784
    %v787 = vmul.u32 %v782, %v785
    %v788 = vmul.u32 %v783, %v784
    %v789 = vmul.u32 %v783, %v785
    %v790 = vshll.u32 %v787, 16
    %v791 = vshrl.u32 %v787, 16
    %v792 = vshll.u32 %v788, 16
    %v793 = vshrl.u32 %v788, 16
    %vm794 = vc.u32 %v786, %v790
    %v795 = vsel %vm794, 1, 0
    %v796 = vadd.s32 %v786, %v790
    %v797 = vadd.s32 %v789, %v795
    %vm798 = vc.u32 %v796, %v792
    %v799 = vsel %vm798, 1, 0
    %v800 = vadd.s32 %v796, %v792
    %v801 = vadd.s32 %v797, %v799
    %v802 = vadd.s32 %v801, %v791
    %v803 = vadd.s32 %v802, %v793
    %v804 = vmul.u32 %v759, %v750
    %v805 = vadd.s32 %v781, %v800
    %vm806 = vc.u32 %v781, %v800
    %v807 = vadd.s32 %v803, 1
    %v808 = vsel %vm806, %v807, %v803
    %v809 = vadd.s32 %v804, %v808
    %v810 = vadd.s32 %v809, 536870912
    %v811 = vshrl.u32 %v810, 30
    %v812 = vshll.u32 %v811, 30
    %v813 = vsub.s32 %v809, %v812
    %vm814 = vcmp.lt.s32.totalorder %v813, 0
    %v815 = vsub.s32 0, %v813
    %v816 = vsel %vm814, %v815, %v813
    %v817 = vclz %v816
    %v818 = vsub.s32 %v817, 2
    %vm819 = vcmp.gt.s32.totalorder 0, %v818
    %v820 = vsel %vm819, 0, %v818
    %v821 = vsub.s32 32, %v820
    %v822 = vshll.u32 %v813, %v820
    %v823 = vshrl.u32 %v805, %v821
    %v824 = vor.u32 %v822, %v823
    %v825 = vsub.s32 4294967266, %v820
    %v826 = vadd.s32 %v825, 127
    %v827 = vshll.u32 %v826, 23
    %v828 = vor.u32 4788187, %v827
    %v829 = vand.u32 2147483647, %v828
    %v831 = vcvt.s32.f32 %v824
    %v832 = vmul.f32 %v831, %v829
    %v833 = vxor.u32 %v832, 2147483648
    %v834 = vsel %vm713, %v833, %v832
    %v835 = vsub.s32 4, %v811
    %v836 = vsel %vm713, %v835, %v811
    %v837 = vsel %vm712, %v87, %v834
    %v838 = vsel %vm712, 0, %v836
    %v839 = vmul.f32 %v837, %v837
    %v840 = vmul.f32 %v839, -0.001358992
    %v841 = vadd.f32 %v840, 0.041655596
    %v842 = vmul.f32 %v839, %v841
    %v843 = vadd.f32 %v842, -0.4999988
    %v844 = vmul.f32 %v839, %v843
    %v845 = vadd.f32 1.0, %v844
    %v846 = vmul.f32 %v837, %v837
    %v847 = vmul.f32 %v846, -0.00019511016
    %v848 = vadd.f32 %v847, 0.008332121
    %v849 = vmul.f32 %v846, %v848
    %v850 = vadd.f32 %v849, -0.16666654
    %v851 = vmul.f32 %v846, %v850
    %v852 = vadd.f32 %v851, 1.0
    %v853 = vmul.f32 %v852, %v837
    %vm854 = vweird.f32 %v87
    %v855 = vadd.s32 %v838, 3
    %v856 = vand.u32 %v855, 3
    %vm857 = vcmp.lt.s32.totalorder %v856, 2
    %vm858 = vcmp.eq.s32.totalorder %v856, 0
    %v859 = vxor.u32 %v853, 2147483648
    %v860 = vsel %vm858, %v845, %v859
    %vm861 = vcmp.eq.s32.totalorder %v856, 2
    %v862 = vxor.u32 %v845, 2147483648
    %v863 = vsel %vm861, %v862, %v853
    %v864 = vsel %vm857, %v860, %v863
    %v865 = vsel %vm854, nan, %v864
    %v866 = vand.u32 2147483647, %v88
    %vm867 = vcmp.le.f32.partialorder %v866, 0.7853982
    %vm868 = vcmp.lt.s32.totalorder %v88, 0
    %v869 = vand.u32 %v88, 2139095040
    %v870 = vshrl.u32 %v869, 23
    %v871 = vsub.s32 %v870, 127
    %v872 = vand.u32 2147483647, %v88
    %v873 = vand.u32 %v872, 8388607
    %v874 = vor.u32 %v873, 8388608
    %v875 = vsub.s32 0, %v874
    %v876 = vadd.s32 %v871, 1
    %vm877 = vcmp.gt.s32.totalorder %v876, 0
    %v878 = vsel %vm877, %v876, 0
    %v879 = vshrl.u32 %v878, 5
    %v880 = vand.u32 %v878, 31
    %v881 = vsub.s32 32, %v880
    %v882 = vshrl.u32 683565275, %v881
    %v883 = vshll.u32 683565275, %v880
    %v884 = vshrl.u32 2475754826, %v881
    %v885 = vor.u32 %v883, %v884
    %v886 = vshll.u32 2475754826, %v880
    %v887 = vshrl.u32 2131351028, %v881
    %v888 = vor.u32 %v886, %v887
    %v889 = vshll.u32 2131351028, %v880
    %v890 = vshrl.u32 2102212464, %v881
    %v891 = vor.u32 %v889, %v890
    %v892 = vshll.u32 2102212464, %v880
    %v893 = vshrl.u32 920167782, %v881
    %v894 = vor.u32 %v892, %v893
    %v895 = vshll.u32 920167782, %v880
    %v896 = vshrl.u32 1326507024, %v881
    %v897 = vor.u32 %v895, %v896
    %vm898 = vcmp.lt.s32.totalorder %v879, 1
    %vm899 = vcmp.lt.s32.totalorder %v879, 2
    %vm900 = vcmp.lt.s32.totalorder %v879, 3
    %vm901 = vcmp.lt.s32.totalorder %v879, 4
    %v902 = vsel %vm898, %v882, %v885
    %v903 = vsel %vm901, %v891, 2102212464
    %v904 = vsel %vm900, %v888, %v903
    %v905 = vsel %vm899, %v902, %v904
    %v906 = vsel %vm898, %v885, %v888
    %v907 = vsel %vm901, %v894, 920167782
    %v908 = vsel %vm900, %v891, %v907
    %v909 = vsel %vm899, %v906, %v908
    %v910 = vsel %vm898, %v888, %v891
    %v911 = vsel %vm901, %v897, 1326507024
    %v912 = vsel %vm900, %v894, %v911
    %v913 = vsel %vm899, %v910, %v912
    %v914 = vshll.u32 %v874, 8
    %v915 = vand.u32 %v914, 65535
    %v916 = vshrl.u32 %v914, 16
    %v917 = vand.u32 %v913, 65535
    %v918 = vshrl.u32 %v913, 16
    %v919 = vmul.u32 %v915, %v917
    %v920 = vmul.u32 %v915, %v918
    %v921 = vmul.u32 %v916, %v917
    %v922 = vmul.u32 %v916, %v918
    %v923 = vshll.u32 %v920, 16
    %v924 = vshrl.u32 %v920, 16
    %v925 = vshll.u32 %v921, 16
    %v926 = vshrl.u32 %v921, 16
    %vm927 = vc.u32 %v919, %v923
    %v928 = vsel %vm927, 1, 0
    %v929 = vadd.s32 %v919, %v923
    %v930 = vadd.s32 %v922, %v928
    %vm931 = vc.u32 %v929, %v925
    %v932 = vsel %vm931, 1, 0
    %v933 = vadd.s32 %v929, %v925
    %v934 = vadd.s32 %v930, %v932
    %v935 = vadd.s32 %v934, %v924
    %v936 = vadd.s32 %v935, %v926
    %v937 = vand.u32 %v914, 65535
    %v938 = vshrl.u32 %v914, 16
    %v939 = vand.u32 %v909, 65535
    %v940 = vshrl.u32 %v909, 16
    %v941 = vmul.u32 %v937, %v939
    %v942 = vmul.u32 %v937, %v940
    %v943 = vmul.u32 %v938, %v939
    %v944 = vmul.u32 %v938, %v940
    %v945 = vshll.u32 %v942, 16
    %v946 = vshrl.u32 %v942, 16
    %v947 = vshll.u32 %v943, 16
    %v948 = vshrl.u32 %v943, 16
    %vm949 = vc.u32 %v941, %v945
    %v950 = vsel %vm949, 1, 0
    %v951 = vadd.s32 %v941, %v945
    %v952 = vadd.s32 %v944, %v950
    %vm953 = vc.u32 %v951, %v947
    %v954 = vsel %vm953, 1, 0
    %v955 = vadd.s32 %v951, %v947
    %v956 = vadd.s32 %v952, %v954
    %v957 = vadd.s32 %v956, %v946
    %v958 = vadd.s32 %v957, %v948
    %v959 = vmul.u32 %v914, %v905
    %v960 = vadd.s32 %v936, %v955
    %vm961 = vc.u32 %v936, %v955
    %v962 = vadd.s32 %v958, 1
    %v963 = vsel %vm961, %v962, %v958
    %v964 = vadd.s32 %v959, %v963
    %v965 = vadd.s32 %v964, 536870912
    %v966 = vshrl.u32 %v965, 30
    %v967 = vshll.u32 %v966, 30
    %v968 = vsub.s32 %v964, %v967
    %vm969 = vcmp.lt.s32.totalorder %v968, 0
    %v970 = vsub.s32 0, %v968
    %v971 = vsel %vm969, %v970, %v968
    %v972 = vclz %v971
    %v973 = vsub.s32 %v972, 2
    %vm974 = vcmp.gt.s32.totalorder 0, %v973
    %v975 = vsel %vm974, 0, %v973
    %v976 = vsub.s32 32, %v975
    %v977 = vshll.u32 %v968, %v975
    %v978 = vshrl.u32 %v960, %v976
    %v979 = vor.u32 %v977, %v978
    %v980 = vsub.s32 4294967266, %v975
    %v981 = vadd.s32 %v980, 127
    %v982 = vshll.u32 %v981, 23
    %v983 = vor.u32 4788187, %v982
    %v984 = vand.u32 2147483647, %v983
    %v986 = vcvt.s32.f32 %v979
    %v987 = vmul.f32 %v986, %v984
    %v988 = vxor.u32 %v987, 2147483648
    %v989 = vsel %vm868, %v988, %v987
    %v990 = vsub.s32 4, %v966
    %v991 = vsel %vm868, %v990, %v966
    %v992 = vsel %vm867, %v88, %v989
    %v993 = vsel %vm867, 0, %v991
    %v994 = vmul.f32 %v992, %v992
    %v995 = vmul.f32 %v994, -0.001358992
    %v996 = vadd.f32 %v995, 0.041655596
    %v997 = vmul.f32 %v994, %v996
    %v998 = vadd.f32 %v997, -0.4999988
    %v999 = vmul.f32 %v994, %v998
    %v1000 = vadd.f32 1.0, %v999
    %v1001 = vmul.f32 %v992, %v992
    %v1002 = vmul.f32 %v1001, -0.00019511016
    %v1003 = vadd.f32 %v1002, 0.008332121
    %v1004 = vmul.f32 %v1001, %v1003
    %v1005 = vadd.f32 %v1004, -0.16666654
    %v1006 = vmul.f32 %v1001, %v1005
    %v1007 = vadd.f32 %v1006, 1.0
    %v1008 = vmul.f32 %v1007, %v992
    %vm1009 = vweird.f32 %v88
    %v1010 = vadd.s32 %v993, 3
    %v1011 = vand.u32 %v1010, 3
    %vm1012 = vcmp.lt.s32.totalorder %v1011, 2
    %vm1013 = vcmp.eq.s32.totalorder %v1011, 0
    %v1014 = vxor.u32 %v1008, 2147483648
    %v1015 = vsel %vm1013, %v1000, %v1014
    %vm1016 = vcmp.eq.s32.totalorder %v1011, 2
    %v1017 = vxor.u32 %v1000, 2147483648
    %v1018 = vsel %vm1016, %v1017, %v1008
    %v1019 = vsel %vm1012, %v1015, %v1018
    %v1020 = vsel %vm1009, nan, %v1019
    %v1021 = vand.u32 2147483647, %v89
    %vm1022 = vcmp.le.f32.partialorder %v1021, 0.7853982
    %vm1023 = vcmp.lt.s32.totalorder %v89, 0
    %v1024 = vand.u32 %v89, 2139095040
    %v1025 = vshrl.u32 %v1024, 23
    %v1026 = vsub.s32 %v1025, 127
    %v1027 = vand.u32 2147483647, %v89
    %v1028 = vand.u32 %v1027, 8388607
    %v1029 = vor.u32 %v1028, 8388608
    %v1030 = vsub.s32 0, %v1029
    %v1031 = vadd.s32 %v1026, 1
    %vm1032 = vcmp.gt.s32.totalorder %v1031, 0
    %v1033 = vsel %vm1032, %v1031, 0
    %v1034 = vshrl.u32 %v1033, 5
    %v1035 = vand.u32 %v1033, 31
    %v1036 = vsub.s32 32, %v1035
    %v1037 = vshrl.u32 683565275, %v1036
    %v1038 = vshll.u32 683565275, %v1035
    %v1039 = vshrl.u32 2475754826, %v1036
    %v1040 = vor.u32 %v1038, %v1039
    %v1041 = vshll.u32 2475754826, %v1035
    %v1042 = vshrl.u32 2131351028, %v1036
    %v1043 = vor.u32 %v1041, %v1042
    %v1044 = vshll.u32 2131351028, %v1035
    %v1045 = vshrl.u32 2102212464, %v1036
    %v1046 = vor.u32 %v1044, %v1045
    %v1047 = vshll.u32 2102212464, %v1035
    %v1048 = vshrl.u32 920167782, %v1036
    %v1049 = vor.u32 %v1047, %v1048
    %v1050 = vshll.u32 920167782, %v1035
    %v1051 = vshrl.u32 1326507024, %v1036
    %v1052 = vor.u32 %v1050, %v1051
    %vm1053 = vcmp.lt.s32.totalorder %v1034, 1
    %vm1054 = vcmp.lt.s32.totalorder %v1034, 2
    %vm1055 = vcmp.lt.s32.totalorder %v1034, 3
    %vm1056 = vcmp.lt.s32.totalorder %v1034, 4
    %v1057 = vsel %vm1053, %v1037, %v1040
    %v1058 = vsel %vm1056, %v1046, 2102212464
    %v1059 = vsel %vm1055, %v1043, %v1058
    %v1060 = vsel %vm1054, %v1057, %v1059
    %v1061 = vsel %vm1053, %v1040, %v1043
    %v1062 = vsel %vm1056, %v1049, 920167782
    %v1063 = vsel %vm1055, %v1046, %v1062
    %v1064 = vsel %vm1054, %v1061, %v1063
    %v1065 = vsel %vm1053, %v1043, %v1046
    %v1066 = vsel %vm1056, %v1052, 1326507024
    %v1067 = vsel %vm1055, %v1049, %v1066
    %v1068 = vsel %vm1054, %v1065, %v1067
    %v1069 = vshll.u32 %v1029, 8
    %v1070 = vand.u32 %v1069, 65535
    %v1071 = vshrl.u32 %v1069, 16
    %v1072 = vand.u32 %v1068, 65535
    %v1073 = vshrl.u32 %v1068, 16
    %v1074 = vmul.u32 %v1070, %v1072
    %v1075 = vmul.u32 %v1070, %v1073
    %v1076 = vmul.u32 %v1071, %v1072
    %v1077 = vmul.u32 %v1071, %v1073
    %v1078 = vshll.u32 %v1075, 16
    %v1079 = vshrl.u32 %v1075, 16
    %v1080 = vshll.u32 %v1076, 16
    %v1081 = vshrl.u32 %v1076, 16
    %vm1082 = vc.u32 %v1074, %v1078
    %v1083 = vsel %vm1082, 1, 0
    %v1084 = vadd.s32 %v1074, %v1078
    %v1085 = vadd.s32 %v1077, %v1083
    %vm1086 = vc.u32 %v1084, %v1080
    %v1087 = vsel %vm1086, 1, 0
    %v1088 = vadd.s32 %v1084, %v1080
    %v1089 = vadd.s32 %v1085, %v1087
    %v1090 = vadd.s32 %v1089, %v1079
    %v1091 = vadd.s32 %v1090, %v1081
    %v1092 = vand.u32 %v1069, 65535
    %v1093 = vshrl.u32 %v1069, 16
    %v1094 = vand.u32 %v1064, 65535
    %v1095 = vshrl.u32 %v1064, 16
    %v1096 = vmul.u32 %v1092, %v1094
    %v1097 = vmul.u32 %v1092, %v1095
    %v1098 = vmul.u32 %v1093, %v1094
    %v1099 = vmul.u32 %v1093, %v1095
    %v1100 = vshll.u32 %v1097, 16
    %v1101 = vshrl.u32 %v1097, 16
    %v1102 = vshll.u32 %v1098, 16
    %v1103 = vshrl.u32 %v1098, 16
    %vm1104 = vc.u32 %v1096, %v1100
    %v1105 = vsel %vm1104, 1, 0
    %v1106 = vadd.s32 %v1096, %v1100
    %v1107 = vadd.s32 %v1099, %v1105
    %vm1108 = vc.u32 %v1106, %v1102
    %v1109 = vsel %vm1108, 1, 0
    %v1110 = vadd.s32 %v1106, %v1102
    %v1111 = vadd.s32 %v1107, %v1109
    %v1112 = vadd.s32 %v1111, %v1101
    %v1113 = vadd.s32 %v1112, %v1103
    %v1114 = vmul.u32 %v1069, %v1060
    %v1115 = vadd.s32 %v1091, %v1110
    %vm1116 = vc.u32 %v1091, %v1110
    %v1117 = vadd.s32 %v1113, 1
    %v1118 = vsel %vm1116, %v1117, %v1113
    %v1119 = vadd.s32 %v1114, %v1118
    %v1120 = vadd.s32 %v1119, 536870912
    %v1121 = vshrl.u32 %v1120, 30
    %v1122 = vshll.u32 %v1121, 30
    %v1123 = vsub.s32 %v1119, %v1122
    %vm1124 = vcmp.lt.s32.totalorder %v1123, 0
    %v1125 = vsub.s32 0, %v1123
    %v1126 = vsel %vm1124, %v1125, %v1123
    %v1127 = vclz %v1126
    %v1128 = vsub.s32 %v1127, 2
    %vm1129 = vcmp.gt.s32.totalorder 0, %v1128
    %v1130 = vsel %vm1129, 0, %v1128
    %v1131 = vsub.s32 32, %v1130
    %v1132 = vshll.u32 %v1123, %v1130
    %v1133 = vshrl.u32 %v1115, %v1131
    %v1134 = vor.u32 %v1132, %v1133
    %v1135 = vsub.s32 4294967266, %v1130
    %v1136 = vadd.s32 %v1135, 127
    %v1137 = vshll.u32 %v1136, 23
    %v1138 = vor.u32 4788187, %v1137
    %v1139 = vand.u32 2147483647, %v1138
    %v1141 = vcvt.s32.f32 %v1134
    %v1142 = vmul.f32 %v1141, %v1139
    %v1143 = vxor.u32 %v1142, 2147483648
    %v1144 = vsel %vm1023, %v1143, %v1142
    %v1145 = vsub.s32 4, %v1121
    %v1146 = vsel %vm1023, %v1145, %v1121
    %v1147 = vsel %vm1022, %v89, %v1144
    %v1148 = vsel %vm1022, 0, %v1146
    %v1149 = vmul.f32 %v1147, %v1147
    %v1150 = vmul.f32 %v1149, -0.001358992
    %v1151 = vadd.f32 %v1150, 0.041655596
    %v1152 = vmul.f32 %v1149, %v1151
    %v1153 = vadd.f32 %v1152, -0.4999988
    %v1154 = vmul.f32 %v1149, %v1153
    %v1155 = vadd.f32 1.0, %v1154
    %v1156 = vmul.f32 %v1147, %v1147
    %v1157 = vmul.f32 %v1156, -0.00019511016
    %v1158 = vadd.f32 %v1157, 0.008332121
    %v1159 = vmul.f32 %v1156, %v1158
    %v1160 = vadd.f32 %v1159, -0.16666654
    %v1161 = vmul.f32 %v1156, %v1160
    %v1162 = vadd.f32 %v1161, 1.0
    %v1163 = vmul.f32 %v1162, %v1147
    %vm1164 = vweird.f32 %v89
    %v1165 = vadd.s32 %v1148, 3
    %v1166 = vand.u32 %v1165, 3
    %vm1167 = vcmp.lt.s32.totalorder %v1166, 2
    %vm1168 = vcmp.eq.s32.totalorder %v1166, 0
    %v1169 = vxor.u32 %v1163, 2147483648
    %v1170 = vsel %vm1168, %v1155, %v1169
    %vm1171 = vcmp.eq.s32.totalorder %v1166, 2
    %v1172 = vxor.u32 %v1155, 2147483648
    %v1173 = vsel %vm1171, %v1172, %v1163
    %v1174 = vsel %vm1167, %v1170, %v1173
    %v1175 = vsel %vm1164, nan, %v1174
    %v1176 = vand.u32 2147483647, %v90
    %vm1177 = vcmp.le.f32.partialorder %v1176, 0.7853982
    %vm1178 = vcmp.lt.s32.totalorder %v90, 0
    %v1179 = vand.u32 %v90, 2139095040
    %v1180 = vshrl.u32 %v1179, 23
    %v1181 = vsub.s32 %v1180, 127
    %v1182 = vand.u32 2147483647, %v90
    %v1183 = vand.u32 %v1182, 8388607
    %v1184 = vor.u32 %v1183, 8388608
    %v1185 = vsub.s32 0, %v1184
    %v1186 = vadd.s32 %v1181, 1
    %vm1187 = vcmp.gt.s32.totalorder %v1186, 0
    %v1188 = vsel %vm1187, %v1186, 0
    %v1189 = vshrl.u32 %v1188, 5
    %v1190 = vand.u32 %v1188, 31
    %v1191 = vsub.s32 32, %v1190
    %v1192 = vshrl.u32 683565275, %v1191
    %v1193 = vshll.u32 683565275, %v1190
    %v1194 = vshrl.u32 2475754826, %v1191
    %v1195 = vor.u32 %v1193, %v1194
    %v1196 = vshll.u32 2475754826, %v1190
    %v1197 = vshrl.u32 2131351028, %v1191
    %v1198 = vor.u32 %v1196, %v1197
    %v1199 = vshll.u32 2131351028, %v1190
    %v1200 = vshrl.u32 2102212464, %v1191
    %v1201 = vor.u32 %v1199, %v1200
    %v1202 = vshll.u32 2102212464, %v1190
    %v1203 = vshrl.u32 920167782, %v1191
    %v1204 = vor.u32 %v1202, %v1203
    %v1205 = vshll.u32 920167782, %v1190
    %v1206 = vshrl.u32 1326507024, %v1191
    %v1207 = vor.u32 %v1205, %v1206
    %vm1208 = vcmp.lt.s32.totalorder %v1189, 1
    %vm1209 = vcmp.lt.s32.totalorder %v1189, 2
    %vm1210 = vcmp.lt.s32.totalorder %v1189, 3
    %vm1211 = vcmp.lt.s32.totalorder %v1189, 4
    %v1212 = vsel %vm1208, %v1192, %v1195
    %v1213 = vsel %vm1211, %v1201, 2102212464
    %v1214 = vsel %vm1210, %v1198, %v1213
    %v1215 = vsel %vm1209, %v1212, %v1214
    %v1216 = vsel %vm1208, %v1195, %v1198
    %v1217 = vsel %vm1211, %v1204, 920167782
    %v1218 = vsel %vm1210, %v1201, %v1217
    %v1219 = vsel %vm1209, %v1216, %v1218
    %v1220 = vsel %vm1208, %v1198, %v1201
    %v1221 = vsel %vm1211, %v1207, 1326507024
    %v1222 = vsel %vm1210, %v1204, %v1221
    %v1223 = vsel %vm1209, %v1220, %v1222
    %v1224 = vshll.u32 %v1184, 8
    %v1225 = vand.u32 %v1224, 65535
    %v1226 = vshrl.u32 %v1224, 16
    %v1227 = vand.u32 %v1223, 65535
    %v1228 = vshrl.u32 %v1223, 16
    %v1229 = vmul.u32 %v1225, %v1227
    %v1230 = vmul.u32 %v1225, %v1228
    %v1231 = vmul.u32 %v1226, %v1227
    %v1232 = vmul.u32 %v1226, %v1228
    %v1233 = vshll.u32 %v1230, 16
    %v1234 = vshrl.u32 %v1230, 16
    %v1235 = vshll.u32 %v1231, 16
    %v1236 = vshrl.u32 %v1231, 16
    %vm1237 = vc.u32 %v1229, %v1233
    %v1238 = vsel %vm1237, 1, 0
    %v1239 = vadd.s32 %v1229, %v1233
    %v1240 = vadd.s32 %v1232, %v1238
    %vm1241 = vc.u32 %v1239, %v1235
    %v1242 = vsel %vm1241, 1, 0
    %v1243 = vadd.s32 %v1239, %v1235
    %v1244 = vadd.s32 %v1240, %v1242
    %v1245 = vadd.s32 %v1244, %v1234
    %v1246 = vadd.s32 %v1245, %v1236
    %v1247 = vand.u32 %v1224, 65535
    %v1248 = vshrl.u32 %v1224, 16
    %v1249 = vand.u32 %v1219, 65535
    %v1250 = vshrl.u32 %v1219, 16
    %v1251 = vmul.u32 %v1247, %v1249
    %v1252 = vmul.u32 %v1247, %v1250
    %v1253 = vmul.u32 %v1248, %v1249
    %v1254 = vmul.u32 %v1248, %v1250
    %v1255 = vshll.u32 %v1252, 16
    %v1256 = vshrl.u32 %v1252, 16
    %v1257 = vshll.u32 %v1253, 16
    %v1258 = vshrl.u32 %v1253, 16
    %vm1259 = vc.u32 %v1251, %v1255
    %v1260 = vsel %vm1259, 1, 0
    %v1261 = vadd.s32 %v1251, %v1255
    %v1262 = vadd.s32 %v1254, %v1260
    %vm1263 = vc.u32 %v1261, %v1257
    %v1264 = vsel %vm1263, 1, 0
    %v1265 = vadd.s32 %v1261, %v1257
    %v1266 = vadd.s32 %v1262, %v1264
    %v1267 = vadd.s32 %v1266, %v1256
    %v1268 = vadd.s32 %v1267, %v1258
    %v1269 = vmul.u32 %v1224, %v1215
    %v1270 = vadd.s32 %v1246, %v1265
    %vm1271 = vc.u32 %v1246, %v1265
    %v1272 = vadd.s32 %v1268, 1
    %v1273 = vsel %vm1271, %v1272, %v1268
    %v1274 = vadd.s32 %v1269, %v1273
    %v1275 = vadd.s32 %v1274, 536870912
    %v1276 = vshrl.u32 %v1275, 30
    %v1277 = vshll.u32 %v1276, 30
    %v1278 = vsub.s32 %v1274, %v1277
    %vm1279 = vcmp.lt.s32.totalorder %v1278, 0
    %v1280 = vsub.s32 0, %v1278
    %v1281 = vsel %vm1279, %v1280, %v1278
    %v1282 = vclz %v1281
    %v1283 = vsub.s32 %v1282, 2
    %vm1284 = vcmp.gt.s32.totalorder 0, %v1283
    %v1285 = vsel %vm1284, 0, %v1283
    %v1286 = vsub.s32 32, %v1285
    %v1287 = vshll.u32 %v1278, %v1285
    %v1288 = vshrl.u32 %v1270, %v1286
    %v1289 = vor.u32 %v1287, %v1288
    %v1290 = vsub.s32 4294967266, %v1285
    %v1291 = vadd.s32 %v1290, 127
    %v1292 = vshll.u32 %v1291, 23
    %v1293 = vor.u32 4788187, %v1292
    %v1294 = vand.u32 2147483647, %v1293
    %v1296 = vcvt.s32.f32 %v1289
    %v1297 = vmul.f32 %v1296, %v1294
    %v1298 = vxor.u32 %v1297, 2147483648
    %v1299 = vsel %vm1178, %v1298, %v1297
    %v1300 = vsub.s32 4, %v1276
    %v1301 = vsel %vm1178, %v1300, %v1276
    %v1302 = vsel %vm1177, %v90, %v1299
    %v1303 = vsel %vm1177, 0, %v1301
    %v1304 = vmul.f32 %v1302, %v1302
    %v1305 = vmul.f32 %v1304, -0.001358992
    %v1306 = vadd.f32 %v1305, 0.041655596
    %v1307 = vmul.f32 %v1304, %v1306
    %v1308 = vadd.f32 %v1307, -0.4999988
    %v1309 = vmul.f32 %v1304, %v1308
    %v1310 = vadd.f32 1.0, %v1309
    %v1311 = vmul.f32 %v1302, %v1302
    %v1312 = vmul.f32 %v1311, -0.00019511016
    %v1313 = vadd.f32 %v1312, 0.008332121
    %v1314 = vmul.f32 %v1311, %v1313
    %v1315 = vadd.f32 %v1314, -0.16666654
    %v1316 = vmul.f32 %v1311, %v1315
    %v1317 = vadd.f32 %v1316, 1.0
    %v1318 = vmul.f32 %v1317, %v1302
    %vm1319 = vweird.f32 %v90
    %v1320 = vadd.s32 %v1303, 3
    %v1321 = vand.u32 %v1320, 3
    %vm1322 = vcmp.lt.s32.totalorder %v1321, 2
    %vm1323 = vcmp.eq.s32.totalorder %v1321, 0
    %v1324 = vxor.u32 %v1318, 2147483648
    %v1325 = vsel %vm1323, %v1310, %v1324
    %vm1326 = vcmp.eq.s32.totalorder %v1321, 2
    %v1327 = vxor.u32 %v1310, 2147483648
    %v1328 = vsel %vm1326, %v1327, %v1318
    %v1329 = vsel %vm1322, %v1325, %v1328
    %v1330 = vsel %vm1319, nan, %v1329
    %1331 = vst [vmem:[#allocation7] sm:$0xff] %v245
    %1332 = vst [vmem:[#allocation7 + $0x8] sm:$0xff] %v400
    %1333 = vst [vmem:[#allocation7 + $0x10] sm:$0xff] %v555
    %1334 = vst [vmem:[#allocation7 + $0x18] sm:$0xff] %v710
    %1335 = vst [vmem:[#allocation7 + $0x20] sm:$0xff] %v865
    %1336 = vst [vmem:[#allocation7 + $0x28] sm:$0xff] %v1020
    %1337 = vst [vmem:[#allocation7 + $0x30] sm:$0xff] %v1175
    %1338 = vst [vmem:[#allocation7 + $0x38] sm:$0xff] %v1330
    // Predicated region
    $region18: #{tpu_custom_call.1} parent=1 // pred_check
      _
    $region19: #{tpu_custom_call.1} parent=1 // pred_check_branch
      %1340 = sbr.rel (0) target = $region21
    $region20: #{tpu_custom_call.1} parent=1 // pred_region
      %1342 = vsyncadd [#allocation4], 0
      %s1343 = sshll.u32 [#allocation7], 4
      %s1344 = int_to_ptr.vmem [resolvable:$true] %s1343
      %s1345 = sshll.u32 %s2, 4
      %s1346 = int_to_ptr.hbm [resolvable:$true] %s1345
      %1351 = dma.vmem_to_hbm [thread:$0]  %s1344, 1024, %s1346, [#allocation4], 128, 128, 8
    $region21: #{tpu_custom_call.1} parent=1 // pred_fallthru
      _
    // Predicated region
    $region22: #{tpu_custom_call.1} parent=1 // pred_check
      _
    $region23: #{tpu_custom_call.1} parent=1 // pred_check_branch
      %1353 = sbr.rel (0) target = $region25
    $region24: #{tpu_custom_call.1} parent=1 // pred_region
      %1355 = dma.done [#allocation4], 1024
    $region25: #{tpu_custom_call.1} parent=1 // pred_fallthru
      _
    %1356 = vsyncpa [#allocation3], 1
    %1357 = vsyncpa [#allocation6], 1
    %1358 = vsyncpa [#allocation4], 1

</llo_original>
